<compile_context>
chip_gen: v7x
topology: tpu7x:2x2x1
jax: 0.10.0
libtpu: 0.0.40
codegen_flags: <defaults>
</compile_context>

<pallas_src>
import functools

import jax
import jax.numpy as jnp
from jax.experimental import pallas as pl
from jax.experimental.pallas import tpu as pltpu


def _round_up(x: int, m: int) -> int:
    return ((x + m - 1) // m) * m


def _masked_linear_kernel(x_ref, w_ref, m_ref, b_ref, o_ref, acc_ref):
    k = pl.program_id(2)

    @pl.when(k == 0)
    def _():
        acc_ref[...] = jnp.zeros_like(acc_ref)

    # Fuse the mask into the weight tile in-VMEM (free VPU work under DMA),
    # then contract x's last dim with w's last dim on the MXU.
    mw = (m_ref[...] * w_ref[...]).astype(x_ref.dtype)  # (tn, tk)
    acc_ref[...] += jax.lax.dot_general(
        x_ref[...], mw,
        dimension_numbers=(((1,), (1,)), ((), ())),
        preferred_element_type=jnp.float32,
    )

    @pl.when(k == pl.num_programs(2) - 1)
    def _():
        o_ref[...] = (acc_ref[...] + b_ref[...].astype(jnp.float32)).astype(o_ref.dtype)


def masked_linear(x, weight, mask, bias=None, context=None, cond_weight=None):
    """MaskedLinear forward: x @ (mask*W).T + b  (+ context @ W_ctx.T)."""
    *lead, in_features = x.shape
    out_features = weight.shape[0]
    out_dtype = x.dtype

    x2 = x.reshape(-1, in_features)
    if context is not None:
        c2 = context.reshape(-1, context.shape[-1])
        x2 = jnp.concatenate([x2, c2], axis=-1)
        w_all = jnp.concatenate([weight, cond_weight], axis=-1)
        m_all = jnp.concatenate(
            [mask.astype(weight.dtype), jnp.ones_like(cond_weight)], axis=-1)
    else:
        w_all = weight
        m_all = mask.astype(weight.dtype)

    M, K = x2.shape
    N = out_features

    # Tile sizes: lane dims multiples of 128, sublane dims multiples of 8,
    # capped so blocks stay small enough for v7x's 64 MiB VMEM with
    # double-buffering (each <= 512x512 f32 = 1 MiB).
    tm = min(256, _round_up(M, 8))
    tn = min(512, _round_up(N, 128))
    tk = min(512, _round_up(K, 128))

    Mp, Np, Kp = _round_up(M, tm), _round_up(N, tn), _round_up(K, tk)

    x_p = jnp.pad(x2, ((0, Mp - M), (0, Kp - K)))
    w_p = jnp.pad(w_all, ((0, Np - N), (0, Kp - K)))
    m_p = jnp.pad(m_all, ((0, Np - N), (0, Kp - K)))
    if bias is None:
        b_p = jnp.zeros((1, Np), dtype=w_all.dtype)
    else:
        b_p = jnp.pad(bias.reshape(1, -1), ((0, 0), (0, Np - N)))

    grid = (Mp // tm, Np // tn, Kp // tk)

    out = pl.pallas_call(
        _masked_linear_kernel,
        out_shape=jax.ShapeDtypeStruct((Mp, Np), out_dtype),
        grid_spec=pltpu.PrefetchScalarGridSpec(
            num_scalar_prefetch=0,
            grid=grid,
            in_specs=[
                pl.BlockSpec((tm, tk), lambda i, j, k: (i, k)),   # x
                pl.BlockSpec((tn, tk), lambda i, j, k: (j, k)),   # weight
                pl.BlockSpec((tn, tk), lambda i, j, k: (j, k)),   # mask
                pl.BlockSpec((1, tn), lambda i, j, k: (0, j)),    # bias
            ],
            out_specs=pl.BlockSpec((tm, tn), lambda i, j, k: (i, j)),
            scratch_shapes=[pltpu.VMEM((tm, tn), jnp.float32)],
        ),
        compiler_params=pltpu.CompilerParams(
            dimension_semantics=("parallel", "parallel", "arbitrary")),
    )(x_p, w_p, m_p, b_p)

    out = out[:M, :N]
    return out.reshape(*lead, N)


if __name__ == "__main__":
    key = jax.random.PRNGKey(0)
    ks = jax.random.split(key, 6)

    # Small shapes consistent with MaskedLinear usage in a MADE/IAF flow.
    batch, in_f, out_f, ctx_f = 8, 32, 32, 16

    x = jax.random.normal(ks[0], (batch, in_f), dtype=jnp.float32)
    weight = jax.random.normal(ks[1], (out_f, in_f), dtype=jnp.float32) * 0.1
    bias = jax.random.normal(ks[2], (out_f,), dtype=jnp.float32) * 0.1
    mask = (jax.random.uniform(ks[3], (out_f, in_f)) > 0.5).astype(jnp.float32)
    context = jax.random.normal(ks[4], (batch, ctx_f), dtype=jnp.float32)
    cond_weight = jax.random.normal(ks[5], (out_f, ctx_f), dtype=jnp.float32) * 0.1

    # No-context path.
    out_nc = masked_linear(x, weight, mask, bias=bias)
    # Context path (output + cond_linear(context)).
    out_c = masked_linear(x, weight, mask, bias=bias,
                          context=context, cond_weight=cond_weight)
    jax.block_until_ready((out_nc, out_c))

    # Pure-JAX reference.
    ref_nc = x @ (mask * weight).T + bias
    ref_c = ref_nc + context @ cond_weight.T

    assert out_nc.shape == (batch, out_f)
    assert out_c.shape == (batch, out_f)
    assert jnp.allclose(out_nc, ref_nc, atol=1e-5, rtol=1e-5)
    assert jnp.allclose(out_c, ref_c, atol=1e-5, rtol=1e-5)

    print("KERNEL_OK")
</pallas_src>

<mosaic_0001>
module attributes {stable_mosaic.version = 11 : i64} {
  func.func @_masked_linear_kernel(%arg0: i32, %arg1: i32, %arg2: i32, %arg3: memref<8x128xf32, #tpu.memory_space<vmem>>, %arg4: memref<128x128xf32, #tpu.memory_space<vmem>>, %arg5: memref<128x128xf32, #tpu.memory_space<vmem>>, %arg6: memref<1x128xf32, #tpu.memory_space<vmem>>, %arg7: memref<8x128xf32, #tpu.memory_space<vmem>>, %arg8: memref<8x128xf32, #tpu.memory_space<vmem>>) attributes {dimension_semantics = [#tpu.dimension_semantics<parallel>, #tpu.dimension_semantics<parallel>, #tpu.dimension_semantics<arbitrary>], iteration_bounds = array<i64: 1, 1, 1>, scalar_prefetch = 0 : i64, scratch_operands = 1 : i64, tpu.core_type = #tpu.core_type<tc>, window_params = [{transform_indices = @transform_0, window_bounds = array<i64: 8, 128>}, {transform_indices = @transform_1, window_bounds = array<i64: 128, 128>}, {transform_indices = @transform_2, window_bounds = array<i64: 128, 128>}, {transform_indices = @transform_3, window_bounds = array<i64: 1, 128>}, {transform_indices = @transform_4, window_bounds = array<i64: 8, 128>}]} {
    %c0_i32 = arith.constant 0 : i32
    %0 = arith.cmpi eq, %arg2, %c0_i32 : i32
    %1 = arith.extui %0 : i1 to i32
    %c0_i32_0 = arith.constant 0 : i32
    %2 = arith.cmpi ne, %1, %c0_i32_0 : i32
    scf.if %2 {
      %cst_12 = arith.constant 0.000000e+00 : f32
      %14 = vector.broadcast %cst_12 : f32 to vector<8x128xf32>
      %c0_13 = arith.constant 0 : index
      %c0_14 = arith.constant 0 : index
      %15 = vector.load %arg8[%c0_13, %c0_14] : memref<8x128xf32, #tpu.memory_space<vmem>>, vector<8x128xf32>
      tpu.vector_store %arg8[%c0_13, %c0_14], %14 {strides = array<i32>} : memref<8x128xf32, #tpu.memory_space<vmem>>, vector<8x128xf32>,
    } else {
    }
    %c0 = arith.constant 0 : index
    %c0_1 = arith.constant 0 : index
    %3 = vector.load %arg5[%c0, %c0_1] : memref<128x128xf32, #tpu.memory_space<vmem>>, vector<128x128xf32>
    %c0_2 = arith.constant 0 : index
    %c0_3 = arith.constant 0 : index
    %4 = vector.load %arg4[%c0_2, %c0_3] : memref<128x128xf32, #tpu.memory_space<vmem>>, vector<128x128xf32>
    %5 = arith.mulf %3, %4 : vector<128x128xf32>
    %c0_4 = arith.constant 0 : index
    %c0_5 = arith.constant 0 : index
    %6 = vector.load %arg8[%c0_4, %c0_5] : memref<8x128xf32, #tpu.memory_space<vmem>>, vector<8x128xf32>
    %c0_6 = arith.constant 0 : index
    %c0_7 = arith.constant 0 : index
    %7 = vector.load %arg3[%c0_6, %c0_7] : memref<8x128xf32, #tpu.memory_space<vmem>>, vector<8x128xf32>
    %cst = arith.constant dense<0.000000e+00> : vector<8x128xf32>
    %8 = tpu.matmul %7, %5, %cst {dimension_numbers = #tpu.dot_dimension_numbers<[1], [1], [0], [0], [0, 0, 1, 0], [], []>} : vector<8x128xf32>, vector<128x128xf32>, vector<8x128xf32> -> vector<8x128xf32>
    %9 = arith.addf %6, %8 : vector<8x128xf32>
    %c0_8 = arith.constant 0 : index
    %c0_9 = arith.constant 0 : index
    %10 = vector.load %arg8[%c0_8, %c0_9] : memref<8x128xf32, #tpu.memory_space<vmem>>, vector<8x128xf32>
    tpu.vector_store %arg8[%c0_8, %c0_9], %9 {strides = array<i32>} : memref<8x128xf32, #tpu.memory_space<vmem>>, vector<8x128xf32>,
    %c0_i32_10 = arith.constant 0 : i32
    %11 = arith.cmpi eq, %arg2, %c0_i32_10 : i32
    %12 = arith.extui %11 : i1 to i32
    %c0_i32_11 = arith.constant 0 : i32
    %13 = arith.cmpi ne, %12, %c0_i32_11 : i32
    scf.if %13 {
      %c0_12 = arith.constant 0 : index
      %c0_13 = arith.constant 0 : index
      %14 = vector.load %arg8[%c0_12, %c0_13] : memref<8x128xf32, #tpu.memory_space<vmem>>, vector<8x128xf32>
      %c0_14 = arith.constant 0 : index
      %c0_15 = arith.constant 0 : index
      %15 = vector.load %arg6[%c0_14, %c0_15] : memref<1x128xf32, #tpu.memory_space<vmem>>, vector<1x128xf32>
      %16 = vector.broadcast %15 : vector<1x128xf32> to vector<8x128xf32>
      %17 = arith.addf %14, %16 : vector<8x128xf32>
      %c0_16 = arith.constant 0 : index
      %c0_17 = arith.constant 0 : index
      %18 = vector.load %arg7[%c0_16, %c0_17] : memref<8x128xf32, #tpu.memory_space<vmem>>, vector<8x128xf32>
      tpu.vector_store %arg7[%c0_16, %c0_17], %17 {strides = array<i32>} : memref<8x128xf32, #tpu.memory_space<vmem>>, vector<8x128xf32>,
    } else {
    }
    return
  }
  func.func @transform_0(%arg0: i32, %arg1: i32, %arg2: i32) -> (i32, i32) {
    %c0_i32 = arith.constant 0 : i32
    return %arg0, %arg2 : i32, i32
  }
  func.func @transform_1(%arg0: i32, %arg1: i32, %arg2: i32) -> (i32, i32) {
    %c0_i32 = arith.constant 0 : i32
    return %arg1, %arg2 : i32, i32
  }
  func.func @transform_2(%arg0: i32, %arg1: i32, %arg2: i32) -> (i32, i32) {
    %c0_i32 = arith.constant 0 : i32
    return %arg1, %arg2 : i32, i32
  }
  func.func @transform_3(%arg0: i32, %arg1: i32, %arg2: i32) -> (i32, i32) {
    %c0_i32 = arith.constant 0 : i32
    %c0_i32_0 = arith.constant 0 : i32
    return %c0_i32, %arg1 : i32, i32
  }
  func.func @transform_4(%arg0: i32, %arg1: i32, %arg2: i32) -> (i32, i32) {
    %c0_i32 = arith.constant 0 : i32
    return %arg0, %arg1 : i32, i32
  }
}

</mosaic_0001>

<llo_original>
// kernel: tpu_custom_call.1
$region0: #{tpu_custom_call.1}
  #allocation0 [shape = 'u32[]', space=smem, size = 0x4, offset = 0x4, fixed_abs, tag = 'smem constant byte address 0x4 - core index']
  #allocation1 [shape = 'u32[144,128]{1,0:T(1,128)}', space=vmem, size = 0x12000, scoped, tag = 'internal scratch']
  #allocation2 [shape = 'f32[8,128]{1,0:T(8,128)}', space=vmem, size = 0x1000, scoped, tag = 'scratch operand']
  %s0 = inlined_call_operand.hbm [shape: f32[8,128], index: 0, kind: input, shape index: {}]
  %s1 = inlined_call_operand.hbm [shape: f32[128,128], index: 1, kind: input, shape index: {}]
  %s2 = inlined_call_operand.hbm [shape: f32[128,128], index: 2, kind: input, shape index: {}]
  %s3 = inlined_call_operand.vmem [shape: f32[1,128], index: 3, kind: input, shape index: {}]
  %s4 = inlined_call_operand.hbm [shape: f32[8,128], index: 4, kind: output, shape index: {}]
  %s5 = sld [smem:[#allocation0]]
  $region46: #{tpu_custom_call.1} parent=0
    _
  %s7 = ssub.s32 1, %s5
  %s8 = scalar_select 0, %s7, %s5
  $region1: #{tpu_custom_call.1} parent=0
    #allocation3 [shape = 'u8[4096]{0}', space=vmem, size = 0x1000, scoped, tag = 'input window, operand 0, single buffered']
    #allocation4 [shape = 's32[1]{0}', space=sflag, size = 0x4, scoped, tag = 'scoped memory for tpu_custom_call.1']
    #allocation5 [shape = 's32[1]{0}', space=sflag, size = 0x4, scoped, tag = 'scoped memory for tpu_custom_call.1']
    #allocation6 [shape = 'u8[65536]{0}', space=vmem, size = 0x10000, scoped, tag = 'input window, operand 1, single buffered']
    #allocation7 [shape = 's32[1]{0}', space=sflag, size = 0x4, scoped, tag = 'scoped memory for tpu_custom_call.1']
    #allocation8 [shape = 'u8[65536]{0}', space=vmem, size = 0x10000, scoped, tag = 'input window, operand 2, single buffered']
    #allocation9 [shape = 'u8[4096]{0}', space=vmem, size = 0x1000, scoped, tag = 'output window, operand 0, single buffered']
    %9 = vsyncpa [#allocation4], 0
    %10 = vsyncpa [#allocation7], 0
    %11 = vsyncpa [#allocation5], 0
    // Predicated region
    $region2: #{tpu_custom_call.1} parent=1 // pred_check
      _
    $region3: #{tpu_custom_call.1} parent=1 // pred_check_branch
      %13 = sbr.rel (0) target = $region5
    $region4: #{tpu_custom_call.1} parent=1 // pred_region
      %s15 = ssub.s32 128, 128
      %16 = vsyncadd [#allocation4], %s15
      %s18 = sshll.u32 [#allocation3], 4
      %s19 = int_to_ptr.vmem [resolvable:$true] %s18
      %21 = dma.hbm_to_vmem [thread:$0]  %s0, 128, %s19, [#allocation4]
    $region5: #{tpu_custom_call.1} parent=1 // pred_fallthru
      _
    // Predicated region
    $region6: #{tpu_custom_call.1} parent=1 // pred_check
      _
    $region7: #{tpu_custom_call.1} parent=1 // pred_check_branch
      %23 = sbr.rel (0) target = $region9
    $region8: #{tpu_custom_call.1} parent=1 // pred_region
      %s25 = ssub.s32 2048, 2048
      %26 = vsyncadd [#allocation7], %s25
      %s27 = sshll.u32 [#allocation6], 4
      %s28 = int_to_ptr.vmem [resolvable:$true] %s27
      %33 = dma.hbm_to_vmem [thread:$0]  %s1, 2048, %s28, [#allocation7], 128, 128, 8
    $region9: #{tpu_custom_call.1} parent=1 // pred_fallthru
      _
    // Predicated region
    $region10: #{tpu_custom_call.1} parent=1 // pred_check
      _
    $region11: #{tpu_custom_call.1} parent=1 // pred_check_branch
      %35 = sbr.rel (0) target = $region13
    $region12: #{tpu_custom_call.1} parent=1 // pred_region
      %s37 = ssub.s32 2048, 2048
      %38 = vsyncadd [#allocation7], %s37
      %s39 = sshll.u32 [#allocation8], 4
      %s40 = int_to_ptr.vmem [resolvable:$true] %s39
      %45 = dma.hbm_to_vmem [thread:$0]  %s2, 2048, %s40, [#allocation7], 128, 128, 8
    $region13: #{tpu_custom_call.1} parent=1 // pred_fallthru
      _
    // Predicated region
    $region14: #{tpu_custom_call.1} parent=1 // pred_check
      _
    $region15: #{tpu_custom_call.1} parent=1 // pred_check_branch
      %47 = sbr.rel (0) target = $region17
    $region16: #{tpu_custom_call.1} parent=1 // pred_region
      _
    $region17: #{tpu_custom_call.1} parent=1 // pred_fallthru
      _
    // Predicated region
    $region18: #{tpu_custom_call.1} parent=1 // pred_check
      _
    $region19: #{tpu_custom_call.1} parent=1 // pred_check_branch
      %49 = sbr.rel (0) target = $region21
    $region20: #{tpu_custom_call.1} parent=1 // pred_region
      %50 = dma.done [#allocation4], 128
    $region21: #{tpu_custom_call.1} parent=1 // pred_fallthru
      _
    // Predicated region
    $region22: #{tpu_custom_call.1} parent=1 // pred_check
      _
    $region23: #{tpu_custom_call.1} parent=1 // pred_check_branch
      %52 = sbr.rel (0) target = $region25
    $region24: #{tpu_custom_call.1} parent=1 // pred_region
      %53 = dma.done [#allocation7], 2048
    $region25: #{tpu_custom_call.1} parent=1 // pred_fallthru
      _
    // Predicated region
    $region26: #{tpu_custom_call.1} parent=1 // pred_check
      _
    $region27: #{tpu_custom_call.1} parent=1 // pred_check_branch
      %55 = sbr.rel (0) target = $region29
    $region28: #{tpu_custom_call.1} parent=1 // pred_region
      %56 = dma.done [#allocation7], 2048
    $region29: #{tpu_custom_call.1} parent=1 // pred_fallthru
      _
    %p57 = scmp.eq.s32.totalorder 0, 0
    // Predicated region
    $region30: #{tpu_custom_call.1} parent=1 // pred_check
      %p58 = pneg %p57
    $region31: #{tpu_custom_call.1} parent=1 // pred_check_branch
      %60 = sbr.rel (%p58) target = $region33
    $region32: #{tpu_custom_call.1} parent=1 // pred_region
      %61 = vst [vmem:[#allocation2] sm:$0xff] 0.0
    $region33: #{tpu_custom_call.1} parent=1 // pred_fallthru
      _
    %v62 = vld [vmem:[#allocation8] sm:$0xff]
    %v63 = vld [vmem:[#allocation8 + $0x8] sm:$0xff]
    %v64 = vld [vmem:[#allocation8 + $0x10] sm:$0xff]
    %v65 = vld [vmem:[#allocation8 + $0x18] sm:$0xff]
    %v66 = vld [vmem:[#allocation8 + $0x20] sm:$0xff]
    %v67 = vld [vmem:[#allocation8 + $0x28] sm:$0xff]
    %v68 = vld [vmem:[#allocation8 + $0x30] sm:$0xff]
    %v69 = vld [vmem:[#allocation8 + $0x38] sm:$0xff]
    %v70 = vld [vmem:[#allocation8 + $0x40] sm:$0xff]
    %v71 = vld [vmem:[#allocation8 + $0x48] sm:$0xff]
    %v72 = vld [vmem:[#allocation8 + $0x50] sm:$0xff]
    %v73 = vld [vmem:[#allocation8 + $0x58] sm:$0xff]
    %v74 = vld [vmem:[#allocation8 + $0x60] sm:$0xff]
    %v75 = vld [vmem:[#allocation8 + $0x68] sm:$0xff]
    %v76 = vld [vmem:[#allocation8 + $0x70] sm:$0xff]
    %v77 = vld [vmem:[#allocation8 + $0x78] sm:$0xff]
    %v78 = vld [vmem:[#allocation6] sm:$0xff]
    %v79 = vld [vmem:[#allocation6 + $0x8] sm:$0xff]
    %v80 = vld [vmem:[#allocation6 + $0x10] sm:$0xff]
    %v81 = vld [vmem:[#allocation6 + $0x18] sm:$0xff]
    %v82 = vld [vmem:[#allocation6 + $0x20] sm:$0xff]
    %v83 = vld [vmem:[#allocation6 + $0x28] sm:$0xff]
    %v84 = vld [vmem:[#allocation6 + $0x30] sm:$0xff]
    %v85 = vld [vmem:[#allocation6 + $0x38] sm:$0xff]
    %v86 = vld [vmem:[#allocation6 + $0x40] sm:$0xff]
    %v87 = vld [vmem:[#allocation6 + $0x48] sm:$0xff]
    %v88 = vld [vmem:[#allocation6 + $0x50] sm:$0xff]
    %v89 = vld [vmem:[#allocation6 + $0x58] sm:$0xff]
    %v90 = vld [vmem:[#allocation6 + $0x60] sm:$0xff]
    %v91 = vld [vmem:[#allocation6 + $0x68] sm:$0xff]
    %v92 = vld [vmem:[#allocation6 + $0x70] sm:$0xff]
    %v93 = vld [vmem:[#allocation6 + $0x78] sm:$0xff]
    %v94 = vmul.f32 %v62, %v78
    %v95 = vmul.f32 %v63, %v79
    %v96 = vmul.f32 %v64, %v80
    %v97 = vmul.f32 %v65, %v81
    %v98 = vmul.f32 %v66, %v82
    %v99 = vmul.f32 %v67, %v83
    %v100 = vmul.f32 %v68, %v84
    %v101 = vmul.f32 %v69, %v85
    %v102 = vmul.f32 %v70, %v86
    %v103 = vmul.f32 %v71, %v87
    %v104 = vmul.f32 %v72, %v88
    %v105 = vmul.f32 %v73, %v89
    %v106 = vmul.f32 %v74, %v90
    %v107 = vmul.f32 %v75, %v91
    %v108 = vmul.f32 %v76, %v92
    %v109 = vmul.f32 %v77, %v93
    %v110 = vld [vmem:[#allocation2] sm:$0xff]
    %v111 = vld [vmem:[#allocation3] sm:$0xff]
    %112 = vmatprep.subr.mxu0 0.0
    %113 = vmatpush1.xpose.msra.mxu0 %v94
    %114 = vmatprep.subr.mxu0 0.0
    %115 = vmatpush1.xpose.msra.mxu0 %v95
    %116 = vmatprep.subr.mxu0 0.0
    %117 = vmatpush1.xpose.msra.mxu0 %v96
    %118 = vmatprep.subr.mxu0 0.0
    %119 = vmatpush1.xpose.msra.mxu0 %v97
    %120 = vmatprep.subr.mxu0 0.0
    %121 = vmatpush1.xpose.msra.mxu0 %v98
    %122 = vmatprep.subr.mxu0 0.0
    %123 = vmatpush1.xpose.msra.mxu0 %v99
    %124 = vmatprep.subr.mxu0 0.0
    %125 = vmatpush1.xpose.msra.mxu0 %v100
    %126 = vmatprep.subr.mxu0 0.0
    %127 = vmatpush1.xpose.msra.mxu0 %v101
    %128 = vmatprep.subr.mxu0 0.0
    %129 = vmatpush1.xpose.msra.mxu0 %v102
    %130 = vmatprep.subr.mxu0 0.0
    %131 = vmatpush1.xpose.msra.mxu0 %v103
    %132 = vmatprep.subr.mxu0 0.0
    %133 = vmatpush1.xpose.msra.mxu0 %v104
    %134 = vmatprep.subr.mxu0 0.0
    %135 = vmatpush1.xpose.msra.mxu0 %v105
    %136 = vmatprep.subr.mxu0 0.0
    %137 = vmatpush1.xpose.msra.mxu0 %v106
    %138 = vmatprep.subr.mxu0 0.0
    %139 = vmatpush1.xpose.msra.mxu0 %v107
    %140 = vmatprep.subr.mxu0 0.0
    %141 = vmatpush1.xpose.msra.mxu0 %v108
    %142 = vmatprep.subr.mxu0 0.0
    %143 = vmatpush1.xpose.msra.mxu0 %v109
    %144 = vmatprep.subr.mxu0 0.0
    %145 = vmatpush1.xpose.msra.mxu0 0.0
    %146 = vmatprep.subr.mxu0 0.0
    %147 = vmatpush1.xpose.msra.mxu0 0.0
    %148 = vmatprep.subr.mxu0 0.0
    %149 = vmatpush1.xpose.msra.mxu0 0.0
    %150 = vmatprep.subr.mxu0 0.0
    %151 = vmatpush1.xpose.msra.mxu0 0.0
    %152 = vmatprep.subr.mxu0 0.0
    %153 = vmatpush1.xpose.msra.mxu0 0.0
    %154 = vmatprep.subr.mxu0 0.0
    %155 = vmatpush1.xpose.msra.mxu0 0.0
    %156 = vmatprep.subr.mxu0 0.0
    %157 = vmatpush1.xpose.msra.mxu0 0.0
    %158 = vmatprep.subr.mxu0 0.0
    %159 = vmatpush1.xpose.msra.mxu0 0.0
    %160 = vmatprep.subr.mxu0 0.0
    %161 = vmatpush1.xpose.msra.mxu0 0.0
    %162 = vmatprep.subr.mxu0 0.0
    %163 = vmatpush1.xpose.msra.mxu0 0.0
    %164 = vmatprep.subr.mxu0 0.0
    %165 = vmatpush1.xpose.msra.mxu0 0.0
    %166 = vmatprep.subr.mxu0 0.0
    %167 = vmatpush1.xpose.msra.mxu0 0.0
    %168 = vmatprep.subr.mxu0 0.0
    %169 = vmatpush1.xpose.msra.mxu0 0.0
    %170 = vmatprep.subr.mxu0 0.0
    %171 = vmatpush1.xpose.msra.mxu0 0.0
    %172 = vmatprep.subr.mxu0 0.0
    %173 = vmatpush1.xpose.msra.mxu0 0.0
    %174 = vmatprep.subr.mxu0 0.0
    %175 = vmatpush1.xpose.msra.mxu0 0.0
    %176 = vmatprep.mubr.f32.mxu0 0.0
    %177 = vmatmul.mubr.f32.gmra.mrb[0].mxu0 %v111
    %v178 = vpop.f32.mrb[0].mxu0
    %v179 = vadd.f32 0.0, %v178
    %v180 = vpop.f32.mrb[0].mxu0
    %181 = vdwg.mxu0
    %v182 = vadd.f32 %v110, %v179
    %183 = vst [vmem:[#allocation2] sm:$0xff] %v182
    // Predicated region
    $region34: #{tpu_custom_call.1} parent=1 // pred_check
      %p184 = pneg %p57
    $region35: #{tpu_custom_call.1} parent=1 // pred_check_branch
      %186 = sbr.rel (%p184) target = $region37
    $region36: #{tpu_custom_call.1} parent=1 // pred_region
      %v187 = vld [vmem:[#allocation2] sm:$0xff]
      %v188 = vld [vmem:[%s3] sm:$0x1]
      %v190 = vlaneseq
      %v191 = vshrl.u32 %v190, 7
      %v192 = vsub.s32 0, %v191
      %v193 = vrot.slane %v188, %v192
      %v195 = vadd.f32 %v187, %v193
      %196 = vst [vmem:[#allocation9] sm:$0xff] %v195
    $region37: #{tpu_custom_call.1} parent=1 // pred_fallthru
      _
    // Predicated region
    $region38: #{tpu_custom_call.1} parent=1 // pred_check
      _
    $region39: #{tpu_custom_call.1} parent=1 // pred_check_branch
      %198 = sbr.rel (0) target = $region41
    $region40: #{tpu_custom_call.1} parent=1 // pred_region
      %s200 = ssub.s32 128, 128
      %201 = vsyncadd [#allocation5], %s200
      %s203 = sshll.u32 [#allocation9], 4
      %s204 = int_to_ptr.vmem [resolvable:$true] %s203
      %206 = dma.vmem_to_hbm [thread:$0]  %s204, 128, %s4, [#allocation5]
    $region41: #{tpu_custom_call.1} parent=1 // pred_fallthru
      _
    // Predicated region
    $region42: #{tpu_custom_call.1} parent=1 // pred_check
      _
    $region43: #{tpu_custom_call.1} parent=1 // pred_check_branch
      %208 = sbr.rel (0) target = $region45
    $region44: #{tpu_custom_call.1} parent=1 // pred_region
      %209 = dma.done [#allocation5], 128
    $region45: #{tpu_custom_call.1} parent=1 // pred_fallthru
      _
    %210 = vsyncpa [#allocation4], 1
    %211 = vsyncpa [#allocation7], 1
    %212 = vsyncpa [#allocation5], 1

</llo_original>
